<compile_context>
chip_gen: v6e
topology: v6e:2x2x1
jax: 0.10.0
libtpu: 0.0.40
codegen_flags: <defaults>
</compile_context>

<pallas_src>
import math

import jax
import jax.numpy as jnp
from jax.experimental import pallas as pl
from jax.experimental.pallas import tpu as pltpu

_INV_SQRT2 = 1.0 / math.sqrt(2.0)


def _gelu_exact(x):
    # nn.GELU() default = exact erf formulation (computed in f32).
    return 0.5 * x * (1.0 + jax.lax.erf(x * _INV_SQRT2))


def _round_up(v, m):
    return (v + m - 1) // m * m


def dino_head_kernel(x_ref, w1_ref, b1_ref, w2_ref, b2_ref, w3_ref, b3_ref,
                     wlast_ref, o_ref, z_ref):
    # ---- MLP + F.normalize: only once per row tile (out_dim is the inner axis) ----
    @pl.when(pl.program_id(1) == 0)
    def _():
        x = x_ref[...]  # bf16 row tile
        h = jnp.dot(x, w1_ref[...], preferred_element_type=jnp.float32)
        h = _gelu_exact(h + b1_ref[...])
        h = jnp.dot(h.astype(jnp.bfloat16), w2_ref[...],
                    preferred_element_type=jnp.float32)
        h = _gelu_exact(h + b2_ref[...])
        z = jnp.dot(h.astype(jnp.bfloat16), w3_ref[...],
                    preferred_element_type=jnp.float32) + b3_ref[...]
        # F.normalize(z, dim=-1, p=2): z * rsqrt(max(ss, 1e-24)) == z / max(||z||, 1e-12)
        ss = jnp.sum(z * z, axis=-1, keepdims=True)
        z_ref[...] = (z * jax.lax.rsqrt(jnp.maximum(ss, 1e-24))).astype(z_ref.dtype)

    # ---- last layer: weight_norm pre-applied in the wrapper -> plain bf16 matmul ----
    o_ref[...] = jnp.dot(z_ref[...], wlast_ref[...],
                         preferred_element_type=jnp.float32).astype(o_ref.dtype)


def dino_head_forward(x, params, *, tm=512, tn=2048,
                      out_dtype=jnp.bfloat16,
                      vmem_limit_bytes=48 * 1024 * 1024):
    w1, b1, w2, b2, w3, b3, vT = params
    n, in_dim = x.shape
    bottleneck, out_dim = vT.shape

    # Hoisted weight_norm (weight_g == 1, norm_last_layer=True): L2-normalize each
    # column of vT once in XLA instead of per grid step inside the kernel.
    vt_f32 = vT.astype(jnp.float32)
    col_ss = jnp.sum(vt_f32 * vt_f32, axis=0, keepdims=True)
    w_last = (vt_f32 * jax.lax.rsqrt(jnp.maximum(col_ss, 1e-24))).astype(jnp.bfloat16)

    # MXU-native input dtype; f32 accumulation happens in-kernel.
    x = x.astype(jnp.bfloat16)

    # Tile sizes: sublane-aligned TM (mult of 8), lane-dense TN (mult of 128).
    # For v7x keep n_pad // tm >= 2 (even) when possible so both TensorCores work
    # the memory-bound out_dim loop.
    tm = int(min(tm, _round_up(n, 8)))
    tn = int(min(tn, _round_up(out_dim, 128)))
    n_pad = _round_up(n, tm)
    out_pad = _round_up(out_dim, tn)

    if n_pad != n:
        x = jnp.pad(x, ((0, n_pad - n), (0, 0)))
    if out_pad != out_dim:
        w_last = jnp.pad(w_last, ((0, 0), (0, out_pad - out_dim)))

    grid = (n_pad // tm, out_pad // tn)
    vt_bufs = max(1, min(3, grid[1]))  # deeper prefetch on the streamed vT tile

    def const_spec(shape):
        # VMEM-resident block: index never changes -> single buffer (saves ~half the
        # weight VMEM vs the default double-buffered pipeline).
        return pl.BlockSpec(shape, lambda i, j: (0, 0),
                            pipeline_mode=pl.Buffered(1))

    out = pl.pallas_call(
        dino_head_kernel,
        out_shape=jax.ShapeDtypeStruct((n_pad, out_pad), out_dtype),
        grid_spec=pltpu.PrefetchScalarGridSpec(
            num_scalar_prefetch=0,
            grid=grid,
            in_specs=[
                pl.BlockSpec((tm, in_dim), lambda i, j: (i, 0)),      # x row tile
                const_spec(w1.shape), const_spec(b1.shape),           # resident MLP
                const_spec(w2.shape), const_spec(b2.shape),
                const_spec(w3.shape), const_spec(b3.shape),
                pl.BlockSpec((bottleneck, tn), lambda i, j: (0, j),   # normalized vT tile
                             pipeline_mode=pl.Buffered(vt_bufs)),
            ],
            out_specs=pl.BlockSpec((tm, tn), lambda i, j: (i, j)),
            scratch_shapes=[pltpu.VMEM((tm, bottleneck), jnp.bfloat16)],
        ),
        compiler_params=pltpu.CompilerParams(
            dimension_semantics=("parallel", "arbitrary"),
            vmem_limit_bytes=vmem_limit_bytes,
        ),
    )(x, w1, b1, w2, b2, w3, b3, w_last)

    return out[:n, :out_dim]


def init_params(key, in_dim, hidden_dim, bottleneck_dim, out_dim,
                weight_dtype=jnp.bfloat16):
    # Deterministic synthetic init matching DINOHead._init_weights:
    # Linear weights ~ N(0, 0.02), biases = 0; last-layer direction v ~ N(0, 0.02).
    # Matmul weights stored [fan_in, fan_out] in bf16; biases in f32 (added to the
    # f32 accumulator).
    k1, k2, k3, k4 = jax.random.split(key, 4)
    std = 0.02
    w1 = (std * jax.random.normal(k1, (in_dim, hidden_dim), jnp.float32)).astype(weight_dtype)
    b1 = jnp.zeros((1, hidden_dim), jnp.float32)
    w2 = (std * jax.random.normal(k2, (hidden_dim, hidden_dim), jnp.float32)).astype(weight_dtype)
    b2 = jnp.zeros((1, hidden_dim), jnp.float32)
    w3 = (std * jax.random.normal(k3, (hidden_dim, bottleneck_dim), jnp.float32)).astype(weight_dtype)
    b3 = jnp.zeros((1, bottleneck_dim), jnp.float32)
    # PyTorch weight shape is [out_dim, bottleneck]; store transposed for z @ vT.
    v = std * jax.random.normal(k4, (out_dim, bottleneck_dim), jnp.float32)
    vT = v.T.astype(weight_dtype)
    return (w1, b1, w2, b2, w3, b3, vT)


def reference_forward(x, params, out_dtype=jnp.bfloat16):
    # Plain-JAX reference using the same bf16-inputs / f32-accumulation recipe.
    w1, b1, w2, b2, w3, b3, vT = params
    bf16, f32 = jnp.bfloat16, jnp.float32
    h = jnp.dot(x.astype(bf16), w1, preferred_element_type=f32)
    h = _gelu_exact(h + b1)
    h = jnp.dot(h.astype(bf16), w2, preferred_element_type=f32)
    h = _gelu_exact(h + b2)
    z = jnp.dot(h.astype(bf16), w3, preferred_element_type=f32) + b3
    z = z * jax.lax.rsqrt(jnp.maximum(jnp.sum(z * z, -1, keepdims=True), 1e-24))
    vt = vT.astype(f32)
    w_last = (vt * jax.lax.rsqrt(jnp.maximum(jnp.sum(vt * vt, 0, keepdims=True),
                                             1e-24))).astype(bf16)
    return jnp.dot(z.astype(bf16), w_last, preferred_element_type=f32).astype(out_dtype)


if __name__ == "__main__":
    # Small shapes consistent with the module: (N, in_dim, hidden, bottleneck, out).
    N, in_dim, hidden_dim, bottleneck_dim, out_dim = 16, 32, 64, 128, 256

    key = jax.random.PRNGKey(0)
    kx, kp = jax.random.split(key)
    x = jax.random.normal(kx, (N, in_dim), jnp.float32)
    params = init_params(kp, in_dim, hidden_dim, bottleneck_dim, out_dim)

    # Small tiles here so the (N, out_dim) grid is actually exercised: grid = (2, 2).
    out = dino_head_forward(x, params, tm=8, tn=128)
    out = jax.block_until_ready(out)

    ref = reference_forward(x, params)
    assert out.shape == (N, out_dim)
    assert out.dtype == jnp.bfloat16
    assert jnp.allclose(out.astype(jnp.float32), ref.astype(jnp.float32),
                        atol=2e-2, rtol=2e-2), "mismatch vs reference"

    print("KERNEL_OK")
</pallas_src>

<mosaic_0001>
module attributes {stable_mosaic.version = 11 : i64} {
  func.func @dino_head_kernel(%arg0: i32, %arg1: i32, %arg2: memref<8x32xbf16, #tpu.memory_space<vmem>>, %arg3: memref<32x64xbf16, #tpu.memory_space<vmem>>, %arg4: memref<1x64xf32, #tpu.memory_space<vmem>>, %arg5: memref<64x64xbf16, #tpu.memory_space<vmem>>, %arg6: memref<1x64xf32, #tpu.memory_space<vmem>>, %arg7: memref<64x128xbf16, #tpu.memory_space<vmem>>, %arg8: memref<1x128xf32, #tpu.memory_space<vmem>>, %arg9: memref<128x128xbf16, #tpu.memory_space<vmem>>, %arg10: memref<8x128xbf16, #tpu.memory_space<vmem>>, %arg11: memref<8x128xbf16, #tpu.memory_space<vmem>>) attributes {dimension_semantics = [#tpu.dimension_semantics<parallel>, #tpu.dimension_semantics<arbitrary>], iteration_bounds = array<i64: 2, 2>, scalar_prefetch = 0 : i64, scratch_operands = 1 : i64, tpu.core_type = #tpu.core_type<tc>, window_params = [{transform_indices = @transform_0, window_bounds = array<i64: 8, 32>}, {pipeline_mode = #tpu.pipeline_mode<synchronous>, transform_indices = @transform_1, window_bounds = array<i64: 32, 64>}, {pipeline_mode = #tpu.pipeline_mode<synchronous>, transform_indices = @transform_2, window_bounds = array<i64: 1, 64>}, {pipeline_mode = #tpu.pipeline_mode<synchronous>, transform_indices = @transform_3, window_bounds = array<i64: 64, 64>}, {pipeline_mode = #tpu.pipeline_mode<synchronous>, transform_indices = @transform_4, window_bounds = array<i64: 1, 64>}, {pipeline_mode = #tpu.pipeline_mode<synchronous>, transform_indices = @transform_5, window_bounds = array<i64: 64, 128>}, {pipeline_mode = #tpu.pipeline_mode<synchronous>, transform_indices = @transform_6, window_bounds = array<i64: 1, 128>}, {pipeline_mode = #tpu.pipeline_mode<double_buffered>, transform_indices = @transform_7, window_bounds = array<i64: 128, 128>}, {transform_indices = @transform_8, window_bounds = array<i64: 8, 128>}]} {
    %c0_i32 = arith.constant 0 : i32
    %0 = arith.cmpi eq, %arg1, %c0_i32 : i32
    %1 = arith.extui %0 : i1 to i32
    %c0_i32_0 = arith.constant 0 : i32
    %2 = arith.cmpi ne, %1, %c0_i32_0 : i32
    scf.if %2 {
      %c0_6 = arith.constant 0 : index
      %c0_7 = arith.constant 0 : index
      %8 = vector.load %arg2[%c0_6, %c0_7] : memref<8x32xbf16, #tpu.memory_space<vmem>>, vector<8x32xbf16>
      %c0_8 = arith.constant 0 : index
      %c0_9 = arith.constant 0 : index
      %9 = vector.load %arg3[%c0_8, %c0_9] : memref<32x64xbf16, #tpu.memory_space<vmem>>, vector<32x64xbf16>
      %cst_10 = arith.constant dense<0.000000e+00> : vector<8x64xf32>
      %10 = tpu.matmul %8, %9, %cst_10 {dimension_numbers = #tpu.dot_dimension_numbers<[1], [0], [0], [1], [0, 0, 1, 1], [], []>} : vector<8x32xbf16>, vector<32x64xbf16>, vector<8x64xf32> -> vector<8x64xf32>
      %c0_11 = arith.constant 0 : index
      %c0_12 = arith.constant 0 : index
      %11 = vector.load %arg4[%c0_11, %c0_12] : memref<1x64xf32, #tpu.memory_space<vmem>>, vector<1x64xf32>
      %12 = vector.broadcast %11 : vector<1x64xf32> to vector<8x64xf32>
      %13 = arith.addf %10, %12 : vector<8x64xf32>
      %cst_13 = arith.constant 5.000000e-01 : f32
      %14 = vector.broadcast %cst_13 : f32 to vector<8x64xf32>
      %15 = arith.mulf %14, %13 : vector<8x64xf32>
      %cst_14 = arith.constant 0.707106769 : f32
      %16 = vector.broadcast %cst_14 : f32 to vector<8x64xf32>
      %17 = arith.mulf %13, %16 : vector<8x64xf32>
      %18 = math.erf %17 : vector<8x64xf32>
      %cst_15 = arith.constant 1.000000e+00 : f32
      %19 = vector.broadcast %cst_15 : f32 to vector<8x64xf32>
      %20 = arith.addf %19, %18 : vector<8x64xf32>
      %21 = arith.mulf %15, %20 : vector<8x64xf32>
      %22 = arith.truncf %21 : vector<8x64xf32> to vector<8x64xbf16>
      %c0_16 = arith.constant 0 : index
      %c0_17 = arith.constant 0 : index
      %23 = vector.load %arg5[%c0_16, %c0_17] : memref<64x64xbf16, #tpu.memory_space<vmem>>, vector<64x64xbf16>
      %cst_18 = arith.constant dense<0.000000e+00> : vector<8x64xf32>
      %24 = tpu.matmul %22, %23, %cst_18 {dimension_numbers = #tpu.dot_dimension_numbers<[1], [0], [0], [1], [0, 0, 1, 1], [], []>} : vector<8x64xbf16>, vector<64x64xbf16>, vector<8x64xf32> -> vector<8x64xf32>
      %c0_19 = arith.constant 0 : index
      %c0_20 = arith.constant 0 : index
      %25 = vector.load %arg6[%c0_19, %c0_20] : memref<1x64xf32, #tpu.memory_space<vmem>>, vector<1x64xf32>
      %26 = vector.broadcast %25 : vector<1x64xf32> to vector<8x64xf32>
      %27 = arith.addf %24, %26 : vector<8x64xf32>
      %cst_21 = arith.constant 5.000000e-01 : f32
      %28 = vector.broadcast %cst_21 : f32 to vector<8x64xf32>
      %29 = arith.mulf %28, %27 : vector<8x64xf32>
      %cst_22 = arith.constant 0.707106769 : f32
      %30 = vector.broadcast %cst_22 : f32 to vector<8x64xf32>
      %31 = arith.mulf %27, %30 : vector<8x64xf32>
      %32 = math.erf %31 : vector<8x64xf32>
      %cst_23 = arith.constant 1.000000e+00 : f32
      %33 = vector.broadcast %cst_23 : f32 to vector<8x64xf32>
      %34 = arith.addf %33, %32 : vector<8x64xf32>
      %35 = arith.mulf %29, %34 : vector<8x64xf32>
      %36 = arith.truncf %35 : vector<8x64xf32> to vector<8x64xbf16>
      %c0_24 = arith.constant 0 : index
      %c0_25 = arith.constant 0 : index
      %37 = vector.load %arg7[%c0_24, %c0_25] : memref<64x128xbf16, #tpu.memory_space<vmem>>, vector<64x128xbf16>
      %cst_26 = arith.constant dense<0.000000e+00> : vector<8x128xf32>
      %38 = tpu.matmul %36, %37, %cst_26 {dimension_numbers = #tpu.dot_dimension_numbers<[1], [0], [0], [1], [0, 0, 1, 1], [], []>} : vector<8x64xbf16>, vector<64x128xbf16>, vector<8x128xf32> -> vector<8x128xf32>
      %c0_27 = arith.constant 0 : index
      %c0_28 = arith.constant 0 : index
      %39 = vector.load %arg8[%c0_27, %c0_28] : memref<1x128xf32, #tpu.memory_space<vmem>>, vector<1x128xf32>
      %40 = vector.broadcast %39 : vector<1x128xf32> to vector<8x128xf32>
      %41 = arith.addf %38, %40 : vector<8x128xf32>
      %42 = arith.mulf %41, %41 : vector<8x128xf32>
      %cst_29 = arith.constant dense<0.000000e+00> : vector<8xf32>
      %43 = vector.multi_reduction <add>, %42, %cst_29 [1] : vector<8x128xf32> to vector<8xf32>
      %44 = vector.shape_cast %43 : vector<8xf32> to vector<8x1xf32>
      %cst_30 = arith.constant 1.000000e-24 : f32
      %45 = vector.broadcast %cst_30 : f32 to vector<8x1xf32>
      %46 = arith.maximumf %44, %45 : vector<8x1xf32>
      %47 = math.rsqrt %46 : vector<8x1xf32>
      %48 = vector.broadcast %47 : vector<8x1xf32> to vector<8x128xf32>
      %49 = arith.mulf %41, %48 : vector<8x128xf32>
      %50 = arith.truncf %49 : vector<8x128xf32> to vector<8x128xbf16>
      %c0_31 = arith.constant 0 : index
      %c0_32 = arith.constant 0 : index
      %51 = vector.load %arg11[%c0_31, %c0_32] : memref<8x128xbf16, #tpu.memory_space<vmem>>, vector<8x128xbf16>
      tpu.vector_store %arg11[%c0_31, %c0_32], %50 {strides = array<i32>} : memref<8x128xbf16, #tpu.memory_space<vmem>>, vector<8x128xbf16>,
    } else {
    }
    %c0 = arith.constant 0 : index
    %c0_1 = arith.constant 0 : index
    %3 = vector.load %arg11[%c0, %c0_1] : memref<8x128xbf16, #tpu.memory_space<vmem>>, vector<8x128xbf16>
    %c0_2 = arith.constant 0 : index
    %c0_3 = arith.constant 0 : index
    %4 = vector.load %arg9[%c0_2, %c0_3] : memref<128x128xbf16, #tpu.memory_space<vmem>>, vector<128x128xbf16>
    %cst = arith.constant dense<0.000000e+00> : vector<8x128xf32>
    %5 = tpu.matmul %3, %4, %cst {dimension_numbers = #tpu.dot_dimension_numbers<[1], [0], [0], [1], [0, 0, 1, 1], [], []>} : vector<8x128xbf16>, vector<128x128xbf16>, vector<8x128xf32> -> vector<8x128xf32>
    %6 = arith.truncf %5 : vector<8x128xf32> to vector<8x128xbf16>
    %c0_4 = arith.constant 0 : index
    %c0_5 = arith.constant 0 : index
    %7 = vector.load %arg10[%c0_4, %c0_5] : memref<8x128xbf16, #tpu.memory_space<vmem>>, vector<8x128xbf16>
    tpu.vector_store %arg10[%c0_4, %c0_5], %6 {strides = array<i32>} : memref<8x128xbf16, #tpu.memory_space<vmem>>, vector<8x128xbf16>,
    return
  }
  func.func @transform_0(%arg0: i32, %arg1: i32) -> (i32, i32) {
    %c0_i32 = arith.constant 0 : i32
    %c0_i32_0 = arith.constant 0 : i32
    return %arg0, %c0_i32 : i32, i32
  }
  func.func @transform_1(%arg0: i32, %arg1: i32) -> (i32, i32) {
    %c0_i32 = arith.constant 0 : i32
    %c0_i32_0 = arith.constant 0 : i32
    %c0_i32_1 = arith.constant 0 : i32
    return %c0_i32, %c0_i32_0 : i32, i32
  }
  func.func @transform_2(%arg0: i32, %arg1: i32) -> (i32, i32) {
    %c0_i32 = arith.constant 0 : i32
    %c0_i32_0 = arith.constant 0 : i32
    %c0_i32_1 = arith.constant 0 : i32
    return %c0_i32, %c0_i32_0 : i32, i32
  }
  func.func @transform_3(%arg0: i32, %arg1: i32) -> (i32, i32) {
    %c0_i32 = arith.constant 0 : i32
    %c0_i32_0 = arith.constant 0 : i32
    %c0_i32_1 = arith.constant 0 : i32
    return %c0_i32, %c0_i32_0 : i32, i32
  }
  func.func @transform_4(%arg0: i32, %arg1: i32) -> (i32, i32) {
    %c0_i32 = arith.constant 0 : i32
    %c0_i32_0 = arith.constant 0 : i32
    %c0_i32_1 = arith.constant 0 : i32
    return %c0_i32, %c0_i32_0 : i32, i32
  }
  func.func @transform_5(%arg0: i32, %arg1: i32) -> (i32, i32) {
    %c0_i32 = arith.constant 0 : i32
    %c0_i32_0 = arith.constant 0 : i32
    %c0_i32_1 = arith.constant 0 : i32
    return %c0_i32, %c0_i32_0 : i32, i32
  }
  func.func @transform_6(%arg0: i32, %arg1: i32) -> (i32, i32) {
    %c0_i32 = arith.constant 0 : i32
    %c0_i32_0 = arith.constant 0 : i32
    %c0_i32_1 = arith.constant 0 : i32
    return %c0_i32, %c0_i32_0 : i32, i32
  }
  func.func @transform_7(%arg0: i32, %arg1: i32) -> (i32, i32) {
    %c0_i32 = arith.constant 0 : i32
    %c0_i32_0 = arith.constant 0 : i32
    return %c0_i32, %arg1 : i32, i32
  }
  func.func @transform_8(%arg0: i32, %arg1: i32) -> (i32, i32) {
    %c0_i32 = arith.constant 0 : i32
    return %arg0, %arg1 : i32, i32
  }
}

</mosaic_0001>

<llo_original>
// kernel: tpu_custom_call.1
$region0: #{tpu_custom_call.1}
  #allocation0 [shape = 'u32[]', space=smem, size = 0x4, offset = 0x4, fixed_abs, tag = 'smem constant byte address 0x4 - core index']
  #allocation1 [shape = 'u32[144,128]{1,0:T(1,128)}', space=vmem, size = 0x12000, scoped, tag = 'internal scratch']
  #allocation2 [shape = 'bf16[8,128]{1,0:T(8,128)(2,1)}', space=vmem, size = 0x800, scoped, tag = 'scratch operand']
  %s0 = inlined_call_operand.hbm [shape: bf16[16,32], index: 0, kind: input, shape index: {}]
  %s1 = inlined_call_operand.hbm [shape: bf16[32,64], index: 1, kind: input, shape index: {}]
  %s2 = inlined_call_operand.vmem [shape: f32[1,64], index: 2, kind: input, shape index: {}]
  %s3 = inlined_call_operand.hbm [shape: bf16[64,64], index: 3, kind: input, shape index: {}]
  %s4 = inlined_call_operand.vmem [shape: f32[1,64], index: 4, kind: input, shape index: {}]
  %s5 = inlined_call_operand.hbm [shape: bf16[64,128], index: 5, kind: input, shape index: {}]
  %s6 = inlined_call_operand.vmem [shape: f32[1,128], index: 6, kind: input, shape index: {}]
  %s7 = inlined_call_operand.hbm [shape: bf16[128,256], index: 7, kind: input, shape index: {}]
  %s8 = inlined_call_operand.hbm [shape: bf16[16,256], index: 8, kind: output, shape index: {}]
  %s9 = sld [smem:[#allocation0]]
  $region89: #{tpu_custom_call.1} parent=0
    _
  %s11 = ssub.s32 1, %s9
  %s12 = scalar_select 0, %s11, %s9
  $region1: #{tpu_custom_call.1} parent=0
    #allocation3 [shape = 'u8[4096]{0}', space=vmem, size = 0x1000, scoped, tag = 'input window, operand 0']
    #allocation4 [shape = 's32[2]{0}', space=sflag, size = 0x8, scoped, tag = 'scoped memory for tpu_custom_call.1']
    #allocation5 [shape = 's32[2]{0}', space=sflag, size = 0x8, scoped, tag = 'scoped memory for tpu_custom_call.1']
    #allocation6 [shape = 'u8[8192]{0}', space=vmem, size = 0x2000, scoped, tag = 'input window, operand 1, single buffered']
    #allocation7 [shape = 's32[1]{0}', space=sflag, size = 0x4, scoped, tag = 'scoped memory for tpu_custom_call.1']
    #allocation8 [shape = 'u8[16384]{0}', space=vmem, size = 0x4000, scoped, tag = 'input window, operand 3, single buffered']
    #allocation9 [shape = 'u8[16384]{0}', space=vmem, size = 0x4000, scoped, tag = 'input window, operand 5, single buffered']
    #allocation10 [shape = 's32[1]{0}', space=sflag, size = 0x4, scoped, tag = 'scoped memory for tpu_custom_call.1']
    #allocation11 [shape = 'u8[65536]{0}', space=vmem, size = 0x10000, scoped, tag = 'input window, operand 7']
    #allocation12 [shape = 'u8[4096]{0}', space=vmem, size = 0x1000, scoped, tag = 'output window, operand 0']
    %13 = vsyncpa [#allocation4], 0
    %s14 = scalar_lea.sflag [#allocation4], 1
    %15 = vsyncpa %s14, 0
    %16 = vsyncpa [#allocation7], 0
    %17 = vsyncpa [#allocation10], 0
    %18 = vsyncpa [#allocation5], 0
    %s19 = scalar_lea.sflag [#allocation5], 1
    %20 = vsyncpa %s19, 0
    loop: start=0, step=1, limit=6
    $region2: #{tpu_custom_call.1} parent=1 // loop_pre_header
      _
    $region3: #{tpu_custom_call.1} parent=1 // loop_header
      %s22 = sphi 0, %s26
      %p23 = scmp.ge.s32.totalorder %s22, 6
      %s29 = sphi 0, %s41
      %s30 = sphi 0, %s37
      %s31 = sphi 0, %s29
      %s32 = sphi 0, %s30
      %s33 = sphi 0, %s31
      %s34 = sphi 0, %s32
      %s44 = sphi 0, %s46
      %s47 = sphi 0, %s44
      %s48 = sphi 0, %s47
      %s64 = sphi 0, %s48
      %s68 = sphi 0, %s68
      %s70 = sphi 0, %s68
      %s71 = sphi 0, %s70
      %s85 = sphi 0, %s71
      %s89 = sphi 0, %s89
      %s91 = sphi 0, %s89
      %s92 = sphi 0, %s91
      %s106 = sphi 0, %s92
      %s110 = sphi 0, %s110
      %s112 = sphi 0, %s110
      %s113 = sphi 0, %s112
      %s127 = sphi 0, %s113
      %s131 = sphi 0, %s131
      %s133 = sphi 0, %s131
      %s134 = sphi 0, %s133
      %s148 = sphi 0, %s134
      %s152 = sphi 0, %s152
      %s154 = sphi 0, %s152
      %s155 = sphi 0, %s154
      %s169 = sphi 0, %s155
      %s173 = sphi 0, %s173
      %s175 = sphi 0, %s173
      %s176 = sphi 0, %s175
      %s190 = sphi 0, %s176
      %s196 = sphi 0, %s198
      %s199 = sphi 0, %s196
      %s200 = sphi 0, %s199
      %s216 = sphi 0, %s200
      %s224 = sphi 0, %s226
      %s227 = sphi 0, %s224
      %s228 = sphi 0, %s227
      %s244 = sphi 0, %s228
    $region4: #{tpu_custom_call.1} parent=1 // loop_header_branch
      %25 = sbr.rel (%p23) target = $region8
    $region5: #{tpu_custom_call.1} parent=1 // loop_body
      %s27 = ssub.s32 %s22, 1
      %s28 = ssub.s32 %s22, 2
      %s35 = sadd.s32 1, %s30
      %p36 = scmp.ge.s32.totalorder %s35, 2
      %s37 = scalar_select %p36, 0, %s35
      %s38 = sadd.s32 1, %s29
      %s39 = scalar_select %p36, %s38, %s29
      %p40 = scmp.ge.s32.totalorder %s39, 2
      %s41 = scalar_select %p40, 0, %s39
      %s42 = ssub.s32 %s29, %s41
      %p43 = scmp.eq.s32.totalorder %s42, 0
      %s45 = sadd.s32 %s44, 1
      %s46 = scalar_select %p43, %s44, %s45
      %p49 = pneg %p43
      %p50 = scmp.eq.s32.totalorder %s22, 3
      %p51 = por %p49, %p50
      %p52 = scmp.ne.s32.totalorder %s44, %s47
      %p53 = scmp.eq.s32.totalorder %s22, 0
      %p54 = por %p52, %p53
      %p55 = scmp.ne.s32.totalorder %s44, %s47
      %p56 = scmp.eq.s32.totalorder %s27, 3
      %p57 = por %p55, %p56
      %p58 = scmp.ne.s32.totalorder %s47, %s48
      %p59 = scmp.eq.s32.totalorder %s27, 0
      %p60 = por %p58, %p59
      %p61 = scmp.ne.s32.totalorder %s47, %s48
      %p62 = scmp.eq.s32.totalorder %s28, 3
      %p63 = por %p61, %p62
      %p65 = scmp.ne.s32.totalorder %s48, %s64
      %p66 = scmp.eq.s32.totalorder %s28, 0
      %p67 = por %p65, %p66
      %s69 = sadd.s32 %s68, 1
      %p72 = scmp.eq.s32.totalorder %s22, 3
      %p73 = scmp.ne.s32.totalorder %s68, %s70
      %p74 = scmp.eq.s32.totalorder %s22, 0
      %p75 = por %p73, %p74
      %p76 = scmp.ne.s32.totalorder %s68, %s70
      %p77 = scmp.eq.s32.totalorder %s27, 3
      %p78 = por %p76, %p77
      %p79 = scmp.ne.s32.totalorder %s70, %s71
      %p80 = scmp.eq.s32.totalorder %s27, 0
      %p81 = por %p79, %p80
      %p82 = scmp.ne.s32.totalorder %s70, %s71
      %p83 = scmp.eq.s32.totalorder %s28, 3
      %p84 = por %p82, %p83
      %p86 = scmp.ne.s32.totalorder %s71, %s85
      %p87 = scmp.eq.s32.totalorder %s28, 0
      %p88 = por %p86, %p87
      %s90 = sadd.s32 %s89, 1
      %p93 = scmp.eq.s32.totalorder %s22, 3
      %p94 = scmp.ne.s32.totalorder %s89, %s91
      %p95 = scmp.eq.s32.totalorder %s22, 0
      %p96 = por %p94, %p95
      %p97 = scmp.ne.s32.totalorder %s89, %s91
      %p98 = scmp.eq.s32.totalorder %s27, 3
      %p99 = por %p97, %p98
      %p100 = scmp.ne.s32.totalorder %s91, %s92
      %p101 = scmp.eq.s32.totalorder %s27, 0
      %p102 = por %p100, %p101
      %p103 = scmp.ne.s32.totalorder %s91, %s92
      %p104 = scmp.eq.s32.totalorder %s28, 3
      %p105 = por %p103, %p104
      %p107 = scmp.ne.s32.totalorder %s92, %s106
      %p108 = scmp.eq.s32.totalorder %s28, 0
      %p109 = por %p107, %p108
      %s111 = sadd.s32 %s110, 1
      %p114 = scmp.eq.s32.totalorder %s22, 3
      %p115 = scmp.ne.s32.totalorder %s110, %s112
      %p116 = scmp.eq.s32.totalorder %s22, 0
      %p117 = por %p115, %p116
      %p118 = scmp.ne.s32.totalorder %s110, %s112
      %p119 = scmp.eq.s32.totalorder %s27, 3
      %p120 = por %p118, %p119
      %p121 = scmp.ne.s32.totalorder %s112, %s113
      %p122 = scmp.eq.s32.totalorder %s27, 0
      %p123 = por %p121, %p122
      %p124 = scmp.ne.s32.totalorder %s112, %s113
      %p125 = scmp.eq.s32.totalorder %s28, 3
      %p126 = por %p124, %p125
      %p128 = scmp.ne.s32.totalorder %s113, %s127
      %p129 = scmp.eq.s32.totalorder %s28, 0
      %p130 = por %p128, %p129
      %s132 = sadd.s32 %s131, 1
      %p135 = scmp.eq.s32.totalorder %s22, 3
      %p136 = scmp.ne.s32.totalorder %s131, %s133
      %p137 = scmp.eq.s32.totalorder %s22, 0
      %p138 = por %p136, %p137
      %p139 = scmp.ne.s32.totalorder %s131, %s133
      %p140 = scmp.eq.s32.totalorder %s27, 3
      %p141 = por %p139, %p140
      %p142 = scmp.ne.s32.totalorder %s133, %s134
      %p143 = scmp.eq.s32.totalorder %s27, 0
      %p144 = por %p142, %p143
      %p145 = scmp.ne.s32.totalorder %s133, %s134
      %p146 = scmp.eq.s32.totalorder %s28, 3
      %p147 = por %p145, %p146
      %p149 = scmp.ne.s32.totalorder %s134, %s148
      %p150 = scmp.eq.s32.totalorder %s28, 0
      %p151 = por %p149, %p150
      %s153 = sadd.s32 %s152, 1
      %p156 = scmp.eq.s32.totalorder %s22, 3
      %p157 = scmp.ne.s32.totalorder %s152, %s154
      %p158 = scmp.eq.s32.totalorder %s22, 0
      %p159 = por %p157, %p158
      %p160 = scmp.ne.s32.totalorder %s152, %s154
      %p161 = scmp.eq.s32.totalorder %s27, 3
      %p162 = por %p160, %p161
      %p163 = scmp.ne.s32.totalorder %s154, %s155
      %p164 = scmp.eq.s32.totalorder %s27, 0
      %p165 = por %p163, %p164
      %p166 = scmp.ne.s32.totalorder %s154, %s155
      %p167 = scmp.eq.s32.totalorder %s28, 3
      %p168 = por %p166, %p167
      %p170 = scmp.ne.s32.totalorder %s155, %s169
      %p171 = scmp.eq.s32.totalorder %s28, 0
      %p172 = por %p170, %p171
      %s174 = sadd.s32 %s173, 1
      %p177 = scmp.eq.s32.totalorder %s22, 3
      %p178 = scmp.ne.s32.totalorder %s173, %s175
      %p179 = scmp.eq.s32.totalorder %s22, 0
      %p180 = por %p178, %p179
      %p181 = scmp.ne.s32.totalorder %s173, %s175
      %p182 = scmp.eq.s32.totalorder %s27, 3
      %p183 = por %p181, %p182
      %p184 = scmp.ne.s32.totalorder %s175, %s176
      %p185 = scmp.eq.s32.totalorder %s27, 0
      %p186 = por %p184, %p185
      %p187 = scmp.ne.s32.totalorder %s175, %s176
      %p188 = scmp.eq.s32.totalorder %s28, 3
      %p189 = por %p187, %p188
      %p191 = scmp.ne.s32.totalorder %s176, %s190
      %p192 = scmp.eq.s32.totalorder %s28, 0
      %p193 = por %p191, %p192
      %s194 = ssub.s32 %s30, %s37
      %p195 = scmp.eq.s32.totalorder %s194, 0
      %s197 = sadd.s32 %s196, 1
      %s198 = scalar_select %p195, %s196, %s197
      %p201 = pneg %p195
      %p202 = scmp.eq.s32.totalorder %s22, 3
      %p203 = por %p201, %p202
      %p204 = scmp.ne.s32.totalorder %s196, %s199
      %p205 = scmp.eq.s32.totalorder %s22, 0
      %p206 = por %p204, %p205
      %p207 = scmp.ne.s32.totalorder %s196, %s199
      %p208 = scmp.eq.s32.totalorder %s27, 3
      %p209 = por %p207, %p208
      %p210 = scmp.ne.s32.totalorder %s199, %s200
      %p211 = scmp.eq.s32.totalorder %s27, 0
      %p212 = por %p210, %p211
      %p213 = scmp.ne.s32.totalorder %s199, %s200
      %p214 = scmp.eq.s32.totalorder %s28, 3
      %p215 = por %p213, %p214
      %p217 = scmp.ne.s32.totalorder %s200, %s216
      %p218 = scmp.eq.s32.totalorder %s28, 0
      %p219 = por %p217, %p218
      %s220 = ssub.s32 %s29, %s41
      %s221 = ssub.s32 %s30, %s37
      %s222 = sor.u32 %s220, %s221
      %p223 = scmp.eq.s32.totalorder %s222, 0
      %s225 = sadd.s32 %s224, 1
      %s226 = scalar_select %p223, %s224, %s225
      %p229 = pneg %p223
      %p230 = scmp.eq.s32.totalorder %s22, 3
      %p231 = por %p229, %p230
      %p232 = scmp.ne.s32.totalorder %s224, %s227
      %p233 = scmp.eq.s32.totalorder %s22, 0
      %p234 = por %p232, %p233
      %p235 = scmp.ne.s32.totalorder %s224, %s227
      %p236 = scmp.eq.s32.totalorder %s27, 3
      %p237 = por %p235, %p236
      %p238 = scmp.ne.s32.totalorder %s227, %s228
      %p239 = scmp.eq.s32.totalorder %s27, 0
      %p240 = por %p238, %p239
      %p241 = scmp.ne.s32.totalorder %s227, %s228
      %p242 = scmp.eq.s32.totalorder %s28, 3
      %p243 = por %p241, %p242
      %p245 = scmp.ne.s32.totalorder %s228, %s244
      %p246 = scmp.eq.s32.totalorder %s28, 0
      %p247 = por %p245, %p246
      %p248 = scmp.le.s32.totalorder 1, %s22
      %p249 = scmp.lt.s32.totalorder %s22, 5
      %p250 = pnand %p248, %p249
      %p251 = pneg %p250
      // Predicated region
      $region9: #{tpu_custom_call.1} parent=5 // pred_check
        _
      $region10: #{tpu_custom_call.1} parent=5 // pred_check_branch
        %253 = sbr.rel (%p250) target = $region12
      $region11: #{tpu_custom_call.1} parent=5 // pred_region
        %s254 = ssub.s32 %s22, 1
        // Predicated region
        $region13: #{tpu_custom_call.1} parent=11 // pred_check
          %p255 = pneg %p81
        $region14: #{tpu_custom_call.1} parent=11 // pred_check_branch
          %257 = sbr.rel (%p255) target = $region16
        $region15: #{tpu_custom_call.1} parent=11 // pred_region
          %s259 = ssub.s32 256, 256
          %260 = vsyncadd [#allocation7], %s259
          %s261 = sshll.u32 [#allocation6], 4
          %s262 = int_to_ptr.vmem [resolvable:$true] %s261
          %267 = dma.hbm_to_vmem [thread:$0]  %s1, 256, %s262, [#allocation7], 64, 64, 4
        $region16: #{tpu_custom_call.1} parent=11 // pred_fallthru
          _
        // Predicated region
        $region17: #{tpu_custom_call.1} parent=11 // pred_check
          %p268 = pneg %p102
        $region18: #{tpu_custom_call.1} parent=11 // pred_check_branch
          %270 = sbr.rel (%p268) target = $region20
        $region19: #{tpu_custom_call.1} parent=11 // pred_region
          _
        $region20: #{tpu_custom_call.1} parent=11 // pred_fallthru
          _
        // Predicated region
        $region21: #{tpu_custom_call.1} parent=11 // pred_check
          %p271 = pneg %p123
        $region22: #{tpu_custom_call.1} parent=11 // pred_check_branch
          %273 = sbr.rel (%p271) target = $region24
        $region23: #{tpu_custom_call.1} parent=11 // pred_region
          %s275 = ssub.s32 512, 512
          %276 = vsyncadd [#allocation7], %s275
          %s277 = sshll.u32 [#allocation8], 4
          %s278 = int_to_ptr.vmem [resolvable:$true] %s277
          %283 = dma.hbm_to_vmem [thread:$0]  %s3, 512, %s278, [#allocation7], 64, 64, 4
        $region24: #{tpu_custom_call.1} parent=11 // pred_fallthru
          _
        // Predicated region
        $region25: #{tpu_custom_call.1} parent=11 // pred_check
          %p284 = pneg %p144
        $region26: #{tpu_custom_call.1} parent=11 // pred_check_branch
          %286 = sbr.rel (%p284) target = $region28
        $region27: #{tpu_custom_call.1} parent=11 // pred_region
          _
        $region28: #{tpu_custom_call.1} parent=11 // pred_fallthru
          _
        // Predicated region
        $region29: #{tpu_custom_call.1} parent=11 // pred_check
          %p287 = pneg %p165
        $region30: #{tpu_custom_call.1} parent=11 // pred_check_branch
          %289 = sbr.rel (%p287) target = $region32
        $region31: #{tpu_custom_call.1} parent=11 // pred_region
          %s291 = ssub.s32 512, 512
          %292 = vsyncadd [#allocation10], %s291
          %s293 = sshll.u32 [#allocation9], 4
          %s294 = int_to_ptr.vmem [resolvable:$true] %s293
          %299 = dma.hbm_to_vmem [thread:$0]  %s5, 512, %s294, [#allocation10], 64, 64, 4
        $region32: #{tpu_custom_call.1} parent=11 // pred_fallthru
          _
        // Predicated region
        $region33: #{tpu_custom_call.1} parent=11 // pred_check
          %p300 = pneg %p186
        $region34: #{tpu_custom_call.1} parent=11 // pred_check_branch
          %302 = sbr.rel (%p300) target = $region36
        $region35: #{tpu_custom_call.1} parent=11 // pred_region
          _
        $region36: #{tpu_custom_call.1} parent=11 // pred_fallthru
          _
      $region12: #{tpu_custom_call.1} parent=5 // pred_fallthru
        _
      %p303 = scmp.lt.s32.totalorder %s22, 4
      // Predicated region
      $region37: #{tpu_custom_call.1} parent=5 // pred_check
        %p304 = pneg %p303
      $region38: #{tpu_custom_call.1} parent=5 // pred_check_branch
        %306 = sbr.rel (%p304) target = $region40
      $region39: #{tpu_custom_call.1} parent=5 // pred_region
        // Predicated region
        $region41: #{tpu_custom_call.1} parent=39 // pred_check
          %p307 = pneg %p54
        $region42: #{tpu_custom_call.1} parent=39 // pred_check_branch
          %309 = sbr.rel (%p307) target = $region44
        $region43: #{tpu_custom_call.1} parent=39 // pred_region
          %s310 = sand.u32 %s22, 1
          %s311 = scalar_lea.sflag [#allocation4], %s310
          %s312 = sand.u32 %s44, 1
          %s313 = smul.addr %s312, 4
          %s314 = scalar_lea.vmem [#allocation3], %s313
          %s316 = ssub.s32 64, 64
          %317 = vsyncadd %s311, %s316
          %s318 = smul.addr %s29, 64
          %s319 = scalar_lea.hbm %s0, %s318
          %s321 = sshll.u32 %s314, 4
          %s322 = int_to_ptr.vmem [resolvable:$true] %s321
          %324 = dma.hbm_to_vmem [thread:$0]  %s319, 64, %s322, %s311
        $region44: #{tpu_custom_call.1} parent=39 // pred_fallthru
          _
        // Predicated region
        $region45: #{tpu_custom_call.1} parent=39 // pred_check
          %p325 = pneg %p206
        $region46: #{tpu_custom_call.1} parent=39 // pred_check_branch
          %327 = sbr.rel (%p325) target = $region48
        $region47: #{tpu_custom_call.1} parent=39 // pred_region
          %s328 = sand.u32 %s22, 1
          %s329 = scalar_lea.sflag [#allocation4], %s328
          %s330 = sand.u32 %s196, 1
          %s331 = smul.addr %s330, 64
          %s332 = scalar_lea.vmem [#allocation11], %s331
          %s334 = ssub.s32 1024, 1024
          %335 = vsyncadd %s329, %s334
          %s336 = smul.addr %s30, 64
          %s337 = scalar_lea.hbm %s7, %s336
          %s338 = sshll.u32 %s332, 4
          %s339 = int_to_ptr.vmem [resolvable:$true] %s338
          %344 = dma.hbm_to_vmem [thread:$0]  %s337, 1024, %s339, %s329, 128, 64, 4
        $region48: #{tpu_custom_call.1} parent=39 // pred_fallthru
          _
      $region40: #{tpu_custom_call.1} parent=5 // pred_fallthru
        _
      %p345 = scmp.le.s32.totalorder 1, %s22
      %p346 = scmp.lt.s32.totalorder %s22, 5
      %p347 = pnand %p345, %p346
      %p348 = pneg %p347
      // Predicated region
      $region49: #{tpu_custom_call.1} parent=5 // pred_check
        _
      $region50: #{tpu_custom_call.1} parent=5 // pred_check_branch
        %350 = sbr.rel (%p347) target = $region52
      $region51: #{tpu_custom_call.1} parent=5 // pred_region
        %s351 = ssub.s32 %s22, 1
        %s352 = sand.u32 %s27, 1
        %s353 = scalar_lea.sflag [#allocation4], %s352
        %s354 = sand.u32 %s47, 1
        %s355 = smul.addr %s354, 4
        %s356 = scalar_lea.vmem [#allocation3], %s355
        // Predicated region
        $region53: #{tpu_custom_call.1} parent=51 // pred_check
          %p357 = pneg %p60
        $region54: #{tpu_custom_call.1} parent=51 // pred_check_branch
          %359 = sbr.rel (%p357) target = $region56
        $region55: #{tpu_custom_call.1} parent=51 // pred_region
          %360 = dma.done %s353, 64
        $region56: #{tpu_custom_call.1} parent=51 // pred_fallthru
          _
        // Predicated region
        $region57: #{tpu_custom_call.1} parent=51 // pred_check
          %p361 = pneg %p81
        $region58: #{tpu_custom_call.1} parent=51 // pred_check_branch
          %363 = sbr.rel (%p361) target = $region60
        $region59: #{tpu_custom_call.1} parent=51 // pred_region
          %364 = dma.done [#allocation7], 256
        $region60: #{tpu_custom_call.1} parent=51 // pred_fallthru
          _
        // Predicated region
        $region61: #{tpu_custom_call.1} parent=51 // pred_check
          %p365 = pneg %p123
        $region62: #{tpu_custom_call.1} parent=51 // pred_check_branch
          %367 = sbr.rel (%p365) target = $region64
        $region63: #{tpu_custom_call.1} parent=51 // pred_region
          %368 = dma.done [#allocation7], 512
        $region64: #{tpu_custom_call.1} parent=51 // pred_fallthru
          _
        // Predicated region
        $region65: #{tpu_custom_call.1} parent=51 // pred_check
          %p369 = pneg %p165
        $region66: #{tpu_custom_call.1} parent=51 // pred_check_branch
          %371 = sbr.rel (%p369) target = $region68
        $region67: #{tpu_custom_call.1} parent=51 // pred_region
          %372 = dma.done [#allocation10], 512
        $region68: #{tpu_custom_call.1} parent=51 // pred_fallthru
          _
        %s373 = sand.u32 %s27, 1
        %s374 = scalar_lea.sflag [#allocation4], %s373
        %s375 = sand.u32 %s199, 1
        %s376 = smul.addr %s375, 64
        %s377 = scalar_lea.vmem [#allocation11], %s376
        // Predicated region
        $region69: #{tpu_custom_call.1} parent=51 // pred_check
          %p378 = pneg %p212
        $region70: #{tpu_custom_call.1} parent=51 // pred_check_branch
          %380 = sbr.rel (%p378) target = $region72
        $region71: #{tpu_custom_call.1} parent=51 // pred_region
          %381 = dma.done %s374, 1024
        $region72: #{tpu_custom_call.1} parent=51 // pred_fallthru
          _
        %s382 = sand.u32 %s27, 1
        %s383 = scalar_lea.sflag [#allocation4], %s382
        %s384 = sand.u32 %s47, 1
        %s385 = smul.addr %s384, 4
        %s386 = scalar_lea.vmem [#allocation3], %s385
        %p387 = pneg %p60
        %p388 = pneg %p57
        %p389 = pneg %p81
        %p390 = pneg %p78
        %p391 = pneg %p102
        %p392 = pneg %p99
        %p393 = pneg %p123
        %p394 = pneg %p120
        %p395 = pneg %p144
        %p396 = pneg %p141
        %p397 = pneg %p165
        %p398 = pneg %p162
        %p399 = pneg %p186
        %p400 = pneg %p183
        %s401 = sand.u32 %s27, 1
        %s402 = scalar_lea.sflag [#allocation4], %s401
        %s403 = sand.u32 %s199, 1
        %s404 = smul.addr %s403, 64
        %s405 = scalar_lea.vmem [#allocation11], %s404
        %p406 = pneg %p212
        %p407 = pneg %p209
        %p408 = pneg %p240
        %p409 = pneg %p237
        %s410 = sand.u32 %s227, 1
        %s411 = scalar_lea.sflag [#allocation5], %s410
        %s412 = sand.u32 %s227, 1
        %s413 = smul.addr %s412, 4
        %s414 = scalar_lea.vmem [#allocation12], %s413
        %p416 = scmp.eq.s32.totalorder %s32, 0
        // Predicated region
        $region73: #{tpu_custom_call.1} parent=51 // pred_check
          %p417 = pneg %p416
        $region74: #{tpu_custom_call.1} parent=51 // pred_check_branch
          %419 = sbr.rel (%p417) target = $region76
        $region75: #{tpu_custom_call.1} parent=51 // pred_region
          %v420 = vld [vmem:[%s356] sm:$0xf]
          %v421 = vld [vmem:[#allocation6] sm:$0xf]
          %v422 = vld [vmem:[#allocation6 + $0x4] sm:$0xf]
          %v423 = vld [vmem:[#allocation6 + $0x8] sm:$0xf]
          %v424 = vld [vmem:[#allocation6 + $0xc] sm:$0xf]
          %v425 = vld [vmem:[%s2] sm:$0x1]
          %v427 = vlaneseq
          %v428 = vshrl.u32 %v427, 7
          %v429 = vsub.s32 0, %v428
          %v430 = vrot.slane %v425, %v429
          %v436 = vunpack.c.l.b16 %v421
          %v437 = vunpack.c.l.b16 %v422
          %v438 = vunpack.c.l.b16 %v423
          %v439 = vunpack.c.l.b16 %v424
          %v440 = vpack.c.b16 %v437, %v436
          %v441 = vpack.c.b16 %v439, %v438
          %vm444 = vcmask 261120
          %v446 = vsel %vm444, %v420, 0
          %448 = vmatprep.subr.bf16.mxu0 0
          %449 = vmatpush1.bf16.msra.mxu0 0
          %450 = vmatprep.subr.bf16.mxu0 0
          %451 = vmatpush1.bf16.msra.mxu0 0
          %452 = vmatprep.subr.bf16.mxu0 0
          %453 = vmatpush1.bf16.msra.mxu0 0
          %454 = vmatprep.subr.bf16.mxu0 0
          %455 = vmatpush1.bf16.msra.mxu0 0
          %456 = vmatprep.subr.bf16.mxu0 0
          %457 = vmatpush1.bf16.msra.mxu0 0
          %458 = vmatprep.subr.bf16.mxu0 0
          %459 = vmatpush1.bf16.msra.mxu0 0
          %460 = vmatprep.subr.bf16.mxu0 0
          %461 = vmatpush1.bf16.msra.mxu0 %v441
          %462 = vmatprep.subr.bf16.mxu0 0
          %463 = vmatpush1.bf16.msra.mxu0 %v440
          %464 = vmatprep.subr.bf16.mxu0 0
          %465 = vmatpush2.bf16.msra.mxu0 0
          %466 = vmatprep.subr.bf16.mxu0 0
          %467 = vmatpush2.bf16.msra.mxu0 0
          %468 = vmatprep.subr.bf16.mxu0 0
          %469 = vmatpush2.bf16.msra.mxu0 0
          %470 = vmatprep.subr.bf16.mxu0 0
          %471 = vmatpush2.bf16.msra.mxu0 0
          %472 = vmatprep.subr.bf16.mxu0 0
          %473 = vmatpush2.bf16.msra.mxu0 0
          %474 = vmatprep.subr.bf16.mxu0 0
          %475 = vmatpush2.bf16.msra.mxu0 0
          %476 = vmatprep.subr.bf16.mxu0 0
          %477 = vmatpush2.bf16.msra.mxu0 0
          %478 = vmatprep.subr.bf16.mxu0 0
          %479 = vmatpush2.bf16.msra.mxu0 0
          %480 = vmatprep.mubr.bf16.mxu0 0
          %481 = vmatmul.mubr.bf16.gmra.mxu0 %v446
          %v482 = vpop.f32.mrf.mxu0
          %v483 = vadd.f32 %v430, %v482
          %v484 = vpop.f32.mrf.mxu0
          %v485 = vpop.f32.mrf.mxu0
          %v486 = vpop.f32.mrf.mxu0
          %487 = vdwg.mxu0
          %v488 = vmul.f32 %v483, 0.5
          %v489 = vmul.f32 %v483, 0.70710677
          %v490 = verf.f32.pop %v489
          %v491 = vadd.f32 %v490, 1.0
          %v492 = vmul.f32 %v488, %v491
          %v493 = vpack.c.bf16 %v492, %v492
          %v494 = vld [vmem:[#allocation8] sm:$0xf]
          %v495 = vld [vmem:[#allocation8 + $0x4] sm:$0xf]
          %v496 = vld [vmem:[#allocation8 + $0x8] sm:$0xf]
          %v497 = vld [vmem:[#allocation8 + $0xc] sm:$0xf]
          %v498 = vld [vmem:[#allocation8 + $0x10] sm:$0xf]
          %v499 = vld [vmem:[#allocation8 + $0x14] sm:$0xf]
          %v500 = vld [vmem:[#allocation8 + $0x18] sm:$0xf]
          %v501 = vld [vmem:[#allocation8 + $0x1c] sm:$0xf]
          %v502 = vld [vmem:[%s4] sm:$0x1]
          %v504 = vlaneseq
          %v505 = vshrl.u32 %v504, 7
          %v506 = vsub.s32 0, %v505
          %v507 = vrot.slane %v502, %v506
          %v517 = vunpack.c.l.b16 %v494
          %v518 = vunpack.c.l.b16 %v495
          %v519 = vunpack.c.l.b16 %v496
          %v520 = vunpack.c.l.b16 %v497
          %v521 = vunpack.c.l.b16 %v498
          %v522 = vunpack.c.l.b16 %v499
          %v523 = vunpack.c.l.b16 %v500
          %v524 = vunpack.c.l.b16 %v501
          %v525 = vpack.c.b16 %v518, %v517
          %v526 = vpack.c.b16 %v520, %v519
          %v527 = vpack.c.b16 %v522, %v521
          %v528 = vpack.c.b16 %v524, %v523
          %vm533 = vcmask 523264
          %v535 = vsel %vm533, %v493, 0
          %537 = vmatprep.subr.bf16.mxu0 0
          %538 = vmatpush1.bf16.msra.mxu0 0
          %539 = vmatprep.subr.bf16.mxu0 0
          %540 = vmatpush1.bf16.msra.mxu0 0
          %541 = vmatprep.subr.bf16.mxu0 0
          %542 = vmatpush1.bf16.msra.mxu0 0
          %543 = vmatprep.subr.bf16.mxu0 0
          %544 = vmatpush1.bf16.msra.mxu0 0
          %545 = vmatprep.subr.bf16.mxu0 0
          %546 = vmatpush1.bf16.msra.mxu0 %v528
          %547 = vmatprep.subr.bf16.mxu0 0
          %548 = vmatpush1.bf16.msra.mxu0 %v527
          %549 = vmatprep.subr.bf16.mxu0 0
          %550 = vmatpush1.bf16.msra.mxu0 %v526
          %551 = vmatprep.subr.bf16.mxu0 0
          %552 = vmatpush1.bf16.msra.mxu0 %v525
          %553 = vmatprep.subr.bf16.mxu0 0
          %554 = vmatpush2.bf16.msra.mxu0 0
          %555 = vmatprep.subr.bf16.mxu0 0
          %556 = vmatpush2.bf16.msra.mxu0 0
          %557 = vmatprep.subr.bf16.mxu0 0
          %558 = vmatpush2.bf16.msra.mxu0 0
          %559 = vmatprep.subr.bf16.mxu0 0
          %560 = vmatpush2.bf16.msra.mxu0 0
          %561 = vmatprep.subr.bf16.mxu0 0
          %562 = vmatpush2.bf16.msra.mxu0 0
          %563 = vmatprep.subr.bf16.mxu0 0
          %564 = vmatpush2.bf16.msra.mxu0 0
          %565 = vmatprep.subr.bf16.mxu0 0
          %566 = vmatpush2.bf16.msra.mxu0 0
          %567 = vmatprep.subr.bf16.mxu0 0
          %568 = vmatpush2.bf16.msra.mxu0 0
          %569 = vmatprep.mubr.bf16.mxu0 0
          %570 = vmatmul.mubr.bf16.gmra.mxu0 %v535
          %v571 = vpop.f32.mrf.mxu0
          %v572 = vadd.f32 %v507, %v571
          %v573 = vpop.f32.mrf.mxu0
          %v574 = vpop.f32.mrf.mxu0
          %v575 = vpop.f32.mrf.mxu0
          %576 = vdwg.mxu0
          %v577 = vmul.f32 %v572, 0.5
          %v578 = vmul.f32 %v572, 0.70710677
          %v579 = verf.f32.pop %v578
          %v580 = vadd.f32 %v579, 1.0
          %v581 = vmul.f32 %v577, %v580
          %v582 = vpack.c.bf16 %v581, %v581
          %v583 = vld [vmem:[#allocation9] sm:$0xf]
          %v584 = vld [vmem:[#allocation9 + $0x4] sm:$0xf]
          %v585 = vld [vmem:[#allocation9 + $0x8] sm:$0xf]
          %v586 = vld [vmem:[#allocation9 + $0xc] sm:$0xf]
          %v587 = vld [vmem:[#allocation9 + $0x10] sm:$0xf]
          %v588 = vld [vmem:[#allocation9 + $0x14] sm:$0xf]
          %v589 = vld [vmem:[#allocation9 + $0x18] sm:$0xf]
          %v590 = vld [vmem:[#allocation9 + $0x1c] sm:$0xf]
          %v591 = vld [vmem:[%s6] sm:$0x1]
          %v593 = vlaneseq
          %v594 = vshrl.u32 %v593, 7
          %v595 = vsub.s32 0, %v594
          %v596 = vrot.slane %v591, %v595
          %v606 = vunpack.c.l.b16 %v583
          %v607 = vunpack.c.l.b16 %v584
          %v608 = vunpack.c.l.b16 %v585
          %v609 = vunpack.c.l.b16 %v586
          %v610 = vunpack.c.l.b16 %v587
          %v611 = vunpack.c.l.b16 %v588
          %v612 = vunpack.c.l.b16 %v589
          %v613 = vunpack.c.l.b16 %v590
          %v614 = vpack.c.b16 %v607, %v606
          %v615 = vpack.c.b16 %v609, %v608
          %v616 = vpack.c.b16 %v611, %v610
          %v617 = vpack.c.b16 %v613, %v612
          %v623 = vsel %vm533, %v582, 0
          %625 = vmatprep.subr.bf16.mxu0 0
          %626 = vmatpush1.bf16.msra.mxu0 0
          %627 = vmatprep.subr.bf16.mxu0 0
          %628 = vmatpush1.bf16.msra.mxu0 0
          %629 = vmatprep.subr.bf16.mxu0 0
          %630 = vmatpush1.bf16.msra.mxu0 0
          %631 = vmatprep.subr.bf16.mxu0 0
          %632 = vmatpush1.bf16.msra.mxu0 0
          %633 = vmatprep.subr.bf16.mxu0 0
          %634 = vmatpush1.bf16.msra.mxu0 %v617
          %635 = vmatprep.subr.bf16.mxu0 0
          %636 = vmatpush1.bf16.msra.mxu0 %v616
          %637 = vmatprep.subr.bf16.mxu0 0
          %638 = vmatpush1.bf16.msra.mxu0 %v615
          %639 = vmatprep.subr.bf16.mxu0 0
          %640 = vmatpush1.bf16.msra.mxu0 %v614
          %641 = vmatprep.subr.bf16.mxu0 0
          %642 = vmatpush2.bf16.msra.mxu0 0
          %643 = vmatprep.subr.bf16.mxu0 0
          %644 = vmatpush2.bf16.msra.mxu0 0
          %645 = vmatprep.subr.bf16.mxu0 0
          %646 = vmatpush2.bf16.msra.mxu0 0
          %647 = vmatprep.subr.bf16.mxu0 0
          %648 = vmatpush2.bf16.msra.mxu0 0
          %649 = vmatprep.subr.bf16.mxu0 0
          %650 = vmatpush2.bf16.msra.mxu0 0
          %651 = vmatprep.subr.bf16.mxu0 0
          %652 = vmatpush2.bf16.msra.mxu0 0
          %653 = vmatprep.subr.bf16.mxu0 0
          %654 = vmatpush2.bf16.msra.mxu0 0
          %655 = vmatprep.subr.bf16.mxu0 0
          %656 = vmatpush2.bf16.msra.mxu0 0
          %657 = vmatprep.mubr.bf16.mxu0 0
          %658 = vmatmul.mubr.bf16.gmra.mxu0 %v623
          %v659 = vpop.f32.mrf.mxu0
          %v660 = vadd.f32 %v596, %v659
          %v661 = vpop.f32.mrf.mxu0
          %v662 = vpop.f32.mrf.mxu0
          %v663 = vpop.f32.mrf.mxu0
          %664 = vdwg.mxu0
          %v665 = vmul.f32 %v660, %v660
          %666 = vadd.xlane.f32.xlu0 %v665
          %v667 = vpop.xlane.xlu0 %666
          %v668 = vmax.f32 %v667, 1e-24
          %v669 = vrsqrt.pop %v668
          %v670 = vmul.f32 %v660, %v669
          %v671 = vpack.c.bf16 %v670, %v670
          %672 = vst [vmem:[#allocation2] sm:$0xf] %v671
        $region76: #{tpu_custom_call.1} parent=51 // pred_fallthru
          _
        %v673 = vld [vmem:[#allocation2] sm:$0xf]
        %v674 = vld [vmem:[%s377] sm:$0xf]
        %v675 = vld [vmem:[%s377 + $0x4] sm:$0xf]
        %v676 = vld [vmem:[%s377 + $0x8] sm:$0xf]
        %v677 = vld [vmem:[%s377 + $0xc] sm:$0xf]
        %v678 = vld [vmem:[%s377 + $0x10] sm:$0xf]
        %v679 = vld [vmem:[%s377 + $0x14] sm:$0xf]
        %v680 = vld [vmem:[%s377 + $0x18] sm:$0xf]
        %v681 = vld [vmem:[%s377 + $0x1c] sm:$0xf]
        %v682 = vld [vmem:[%s377 + $0x20] sm:$0xf]
        %v683 = vld [vmem:[%s377 + $0x24] sm:$0xf]
        %v684 = vld [vmem:[%s377 + $0x28] sm:$0xf]
        %v685 = vld [vmem:[%s377 + $0x2c] sm:$0xf]
        %v686 = vld [vmem:[%s377 + $0x30] sm:$0xf]
        %v687 = vld [vmem:[%s377 + $0x34] sm:$0xf]
        %v688 = vld [vmem:[%s377 + $0x38] sm:$0xf]
        %v689 = vld [vmem:[%s377 + $0x3c] sm:$0xf]
        %v706 = vunpack.c.l.b16 %v674
        %v707 = vunpack.c.l.b16 %v675
        %v708 = vunpack.c.l.b16 %v676
        %v709 = vunpack.c.l.b16 %v677
        %v710 = vunpack.c.l.b16 %v678
        %v711 = vunpack.c.l.b16 %v679
        %v712 = vunpack.c.l.b16 %v680
        %v713 = vunpack.c.l.b16 %v681
        %v714 = vunpack.c.l.b16 %v682
        %v715 = vunpack.c.l.b16 %v683
        %v716 = vunpack.c.l.b16 %v684
        %v717 = vunpack.c.l.b16 %v685
        %v718 = vunpack.c.l.b16 %v686
        %v719 = vunpack.c.l.b16 %v687
        %v720 = vunpack.c.l.b16 %v688
        %v721 = vunpack.c.l.b16 %v689
        %v722 = vpack.c.b16 %v707, %v706
        %v723 = vpack.c.b16 %v709, %v708
        %v724 = vpack.c.b16 %v711, %v710
        %v725 = vpack.c.b16 %v713, %v712
        %v726 = vpack.c.b16 %v715, %v714
        %v727 = vpack.c.b16 %v717, %v716
        %v728 = vpack.c.b16 %v719, %v718
        %v729 = vpack.c.b16 %v721, %v720
        %738 = vmatprep.subr.bf16.mxu0 0
        %739 = vmatpush1.bf16.msra.mxu0 %v729
        %740 = vmatprep.subr.bf16.mxu0 0
        %741 = vmatpush1.bf16.msra.mxu0 %v728
        %742 = vmatprep.subr.bf16.mxu0 0
        %743 = vmatpush1.bf16.msra.mxu0 %v727
        %744 = vmatprep.subr.bf16.mxu0 0
        %745 = vmatpush1.bf16.msra.mxu0 %v726
        %746 = vmatprep.subr.bf16.mxu0 0
        %747 = vmatpush1.bf16.msra.mxu0 %v725
        %748 = vmatprep.subr.bf16.mxu0 0
        %749 = vmatpush1.bf16.msra.mxu0 %v724
        %750 = vmatprep.subr.bf16.mxu0 0
        %751 = vmatpush1.bf16.msra.mxu0 %v723
        %752 = vmatprep.subr.bf16.mxu0 0
        %753 = vmatpush1.bf16.msra.mxu0 %v722
        %754 = vmatprep.subr.bf16.mxu0 0
        %755 = vmatpush2.bf16.msra.mxu0 0
        %756 = vmatprep.subr.bf16.mxu0 0
        %757 = vmatpush2.bf16.msra.mxu0 0
        %758 = vmatprep.subr.bf16.mxu0 0
        %759 = vmatpush2.bf16.msra.mxu0 0
        %760 = vmatprep.subr.bf16.mxu0 0
        %761 = vmatpush2.bf16.msra.mxu0 0
        %762 = vmatprep.subr.bf16.mxu0 0
        %763 = vmatpush2.bf16.msra.mxu0 0
        %764 = vmatprep.subr.bf16.mxu0 0
        %765 = vmatpush2.bf16.msra.mxu0 0
        %766 = vmatprep.subr.bf16.mxu0 0
        %767 = vmatpush2.bf16.msra.mxu0 0
        %768 = vmatprep.subr.bf16.mxu0 0
        %769 = vmatpush2.bf16.msra.mxu0 0
        %770 = vmatprep.mubr.bf16.mxu0 0
        %771 = vmatmul.mubr.bf16.gmra.mxu0 %v673
        %v772 = vpop.f32.mrf.mxu0
        %v773 = vadd.f32 0.0, %v772
        %v774 = vpop.f32.mrf.mxu0
        %v775 = vpop.f32.mrf.mxu0
        %v776 = vpop.f32.mrf.mxu0
        %777 = vdwg.mxu0
        %v778 = vpack.c.bf16 %v773, %v773
        %779 = vst [vmem:[%s414] sm:$0xf] %v778
        %s780 = sand.u32 %s227, 1
        %s781 = scalar_lea.sflag [#allocation5], %s780
        %s782 = sand.u32 %s227, 1
        %s783 = smul.addr %s782, 4
        %s784 = scalar_lea.vmem [#allocation12], %s783
        // Predicated region
        $region77: #{tpu_custom_call.1} parent=51 // pred_check
          %p785 = pneg %p237
        $region78: #{tpu_custom_call.1} parent=51 // pred_check_branch
          %787 = sbr.rel (%p785) target = $region80
        $region79: #{tpu_custom_call.1} parent=51 // pred_region
          %s789 = ssub.s32 64, 64
          %790 = vsyncadd %s781, %s789
          %s791 = smul.addr %s31, 2
          %s792 = sadd.s32 %s32, %s791
          %s793 = smul.addr %s792, 64
          %s794 = scalar_lea.hbm %s8, %s793
          %s796 = sshll.u32 %s784, 4
          %s797 = int_to_ptr.vmem [resolvable:$true] %s796
          %799 = dma.vmem_to_hbm [thread:$0]  %s797, 64, %s794, %s781
        $region80: #{tpu_custom_call.1} parent=51 // pred_fallthru
          _
      $region52: #{tpu_custom_call.1} parent=5 // pred_fallthru
        _
      %p800 = scmp.le.s32.totalorder 2, %s22
      // Predicated region
      $region81: #{tpu_custom_call.1} parent=5 // pred_check
        %p801 = pneg %p800
      $region82: #{tpu_custom_call.1} parent=5 // pred_check_branch
        %803 = sbr.rel (%p801) target = $region84
      $region83: #{tpu_custom_call.1} parent=5 // pred_region
        %s804 = ssub.s32 %s22, 2
        // Predicated region
        $region85: #{tpu_custom_call.1} parent=83 // pred_check
          %p805 = pneg %p243
        $region86: #{tpu_custom_call.1} parent=83 // pred_check_branch
          %807 = sbr.rel (%p805) target = $region88
        $region87: #{tpu_custom_call.1} parent=83 // pred_region
          %s808 = sand.u32 %s228, 1
          %s809 = scalar_lea.sflag [#allocation5], %s808
          %s810 = sand.u32 %s228, 1
          %s811 = smul.addr %s810, 4
          %s812 = scalar_lea.vmem [#allocation12], %s811
          %813 = dma.done %s809, 64
        $region88: #{tpu_custom_call.1} parent=83 // pred_fallthru
          _
      $region84: #{tpu_custom_call.1} parent=5 // pred_fallthru
        _
    $region6: #{tpu_custom_call.1} parent=1 // loop_footer
      %s26 = sadd.s32 1, %s22
    $region7: #{tpu_custom_call.1} parent=1 // loop_footer_branch
      %21 = sbr.rel target = $region3
    $region8: #{tpu_custom_call.1} parent=1 // loop_exit
      _
    %814 = vsyncpa [#allocation4], 1
    %s815 = scalar_lea.sflag [#allocation4], 1
    %816 = vsyncpa %s815, 1
    %817 = vsyncpa [#allocation7], 1
    %818 = vsyncpa [#allocation10], 1
    %819 = vsyncpa [#allocation5], 1
    %s820 = scalar_lea.sflag [#allocation5], 1
    %821 = vsyncpa %s820, 1

</llo_original>
